<compile_context>
chip_gen: v6e
topology: v6e:2x2x1
jax: 0.10.0
libtpu: 0.0.40
codegen_flags: <defaults>
</compile_context>

<pallas_src>
import functools

import jax
import jax.numpy as jnp
from jax.experimental import pallas as pl
from jax.experimental.pallas import tpu as pltpu

NUM_CLASSES = 8          # cfg.ROTATION.NUM_CLASSES (synthetic choice)
HIDDEN = 100             # fc1 width, fixed by the module
LANE = 128
DEFAULT_TILE_N = 16384   # original rows per grid step (use ~32768 on v7x)


def _round_up(a, b):
    return ((a + b - 1) // b) * b


def _attribute_kernel(xp_ref, w1_ref, b1_ref, w2_ref, b2_ref, o_ref, *,
                      pack, hidden_pad, training):
    # xp_ref : (tile_p, pack*dim_in)            packed activations
    # w1_ref : (pack*dim_in, pack*hidden_pad)   block-diagonal fc1 weight
    # b1_ref : (1, pack*hidden_pad)
    # w2_ref : (NUM_CLASSES, hidden_pad)        fc2 weight, PyTorch (out,in) layout
    # b2_ref : (NUM_CLASSES, 1)
    # o_ref  : (pack, NUM_CLASSES, tile_p)      transposed, lane-dense output
    xp = xp_ref[...].astype(jnp.float32)

    # fc1 (+bias, ReLU) for all `pack` packed rows at once (block-diagonal weight).
    h = jnp.dot(xp, w1_ref[...], preferred_element_type=jnp.float32)
    h = jnp.maximum(h + b1_ref[...], 0.0)                   # (tile_p, pack*hidden_pad)

    w2 = w2_ref[...]
    b2 = b2_ref[...]
    for j in range(pack):                                    # static unroll
        hj = h[:, j * hidden_pad:(j + 1) * hidden_pad]       # lane-tile aligned view
        # s[c, t] = sum_k w2[c, k] * hj[t, k]  -> scores already transposed (C, tile_p)
        s = jax.lax.dot_general(w2, hj, (((1,), (1,)), ((), ())),
                                preferred_element_type=jnp.float32)
        s = s + b2                                           # (C, tile_p)
        if training:
            o_ref[j, :, :] = s.astype(o_ref.dtype)           # raw logits
        else:
            m = jnp.max(s, axis=0, keepdims=True)            # stable softmax over classes
            e = jnp.exp(s - m)
            denom = jnp.sum(e, axis=0, keepdims=True)
            o_ref[j, :, :] = (e / denom).astype(o_ref.dtype) # exact divide (parity)


def attribute_outputs_forward(x, w1, b1, w2, b2, *, tile_n=DEFAULT_TILE_N,
                              training=False, core_parallel=False):
    """Forward pass of `attribute_outputs`.

    x  : (N, dim_in) or (N, dim_in, 1, 1)   (float32 or bfloat16)
    w1 : (HIDDEN, dim_in)       fc1 weight (PyTorch layout)
    b1 : (HIDDEN,)              fc1 bias
    w2 : (NUM_CLASSES, HIDDEN)  fc2 weight (PyTorch layout)
    b2 : (NUM_CLASSES,)         fc2 bias
    core_parallel: set True on v7x (2 TensorCores) to split the batch grid axis
                   across cores; leave False on single-core parts.
    """
    if x.ndim == 4:
        x = x.reshape(x.shape[0], x.shape[1])    # mirrors x.squeeze(3).squeeze(2)
    n, dim_in = x.shape
    hidden = w1.shape[0]
    num_classes = w2.shape[0]
    hidden_pad = _round_up(hidden, LANE)

    # Pack `pack` consecutive batch rows into one 128-lane super-row.
    pack = min(8, max(1, LANE // dim_in))

    # --- weight preparation (inert zero padding; block-diagonal fc1) -------------
    w1p = jnp.pad(w1.T.astype(jnp.float32), ((0, 0), (0, hidden_pad - hidden)))
    b1p = jnp.pad(b1.astype(jnp.float32), (0, hidden_pad - hidden))
    w1bd = jnp.zeros((pack * dim_in, pack * hidden_pad), jnp.float32)
    for j in range(pack):
        w1bd = w1bd.at[j * dim_in:(j + 1) * dim_in,
                       j * hidden_pad:(j + 1) * hidden_pad].set(w1p)
    b1bd = jnp.tile(b1p, pack).reshape(1, pack * hidden_pad)
    w2p = jnp.pad(w2.astype(jnp.float32), ((0, 0), (0, hidden_pad - hidden)))
    b2c = b2.astype(jnp.float32).reshape(num_classes, 1)

    # --- tiling over packed rows (tile_p is the output lane dim -> multiple of 128)
    n_pack_needed = pl.cdiv(n, pack)
    tile_p = _round_up(max(tile_n // pack, LANE), LANE)
    tile_p = min(tile_p, _round_up(n_pack_needed, LANE))
    if n_pack_needed <= tile_p:
        rows = tile_p * pack            # tiny batch: one full block (cheap pad)
    else:
        rows = _round_up(n, pack)       # only the %pack remainder (<4 rows) is padded;
                                        # the ragged last block is handled by Pallas
    if rows != n:
        x = jnp.pad(x, ((0, rows - n), (0, 0)))
    xp = x.reshape(rows // pack, pack * dim_in)   # free row-major reshape
    p_rows = rows // pack
    grid = (pl.cdiv(p_rows, tile_p),)

    # Raised scoped-VMEM budget: comfortably above every generation's default,
    # safely below v7x's 64 MiB physical VMEM.
    vmem_limit = 48 * 1024 * 1024

    kernel = functools.partial(_attribute_kernel, pack=pack,
                               hidden_pad=hidden_pad, training=training)

    out_t = pl.pallas_call(
        kernel,
        out_shape=jax.ShapeDtypeStruct((pack, num_classes, p_rows), jnp.float32),
        grid=grid,
        in_specs=[
            # packed activations: a fresh row-block per grid step (pipelined)
            pl.BlockSpec((tile_p, pack * dim_in), lambda i: (i, 0)),
            # weights/biases: constant index maps -> fetched once, stay VMEM-resident
            pl.BlockSpec((pack * dim_in, pack * hidden_pad), lambda i: (0, 0)),
            pl.BlockSpec((1, pack * hidden_pad), lambda i: (0, 0)),
            pl.BlockSpec((num_classes, hidden_pad), lambda i: (0, 0)),
            pl.BlockSpec((num_classes, 1), lambda i: (0, 0)),
        ],
        out_specs=pl.BlockSpec((pack, num_classes, tile_p), lambda i: (0, 0, i)),
        compiler_params=pltpu.CompilerParams(
            dimension_semantics=(
                (pltpu.CORE_PARALLEL,) if core_parallel else ("parallel",)),
            vmem_limit_bytes=vmem_limit),
    )(xp, w1bd, b1bd, w2p, b2c)

    # (pack, C, P) -> (P, pack, C) -> (rows, C); slice back to the real batch rows.
    out = out_t.transpose(2, 0, 1).reshape(p_rows * pack, num_classes)
    return out[:n]


def init_params(key, dim_in):
    """Matches _init_weights: normal(std=0.01) weights, zero biases (PyTorch layouts)."""
    k1, k2 = jax.random.split(key)
    w1 = jax.random.normal(k1, (HIDDEN, dim_in), jnp.float32) * 0.01
    w2 = jax.random.normal(k2, (NUM_CLASSES, HIDDEN), jnp.float32) * 0.01
    b1 = jnp.zeros((HIDDEN,), jnp.float32)
    b2 = jnp.zeros((NUM_CLASSES,), jnp.float32)
    return w1, b1, w2, b2


def _reference(x, w1, b1, w2, b2):
    if x.ndim == 4:
        x = x.reshape(x.shape[0], x.shape[1])
    h = jnp.maximum(x @ w1.T + b1, 0.0)
    return jax.nn.softmax(h @ w2.T + b2, axis=1)


if __name__ == "__main__":
    DIM_IN = 32
    key = jax.random.PRNGKey(0)
    kx1, kx2, kx3, kp = jax.random.split(key, 4)
    w1, b1, w2, b2 = init_params(kp, DIM_IN)

    # Case 1: 4-D ROI-pooled feature (N, dim_in, 1, 1) -> exercises the squeeze path.
    x4 = jax.random.normal(kx1, (8, DIM_IN, 1, 1), jnp.float32)
    out1 = jax.block_until_ready(attribute_outputs_forward(x4, w1, b1, w2, b2))
    ref1 = _reference(x4, w1, b1, w2, b2)
    assert out1.shape == (8, NUM_CLASSES)
    assert jnp.allclose(out1, ref1, atol=1e-3), "mismatch vs reference (case 1)"
    assert jnp.allclose(jnp.sum(out1, axis=1), 1.0, atol=1e-3)

    # Case 2: 2-D input with N not a multiple of the packing factor.
    x2 = jax.random.normal(kx2, (10, DIM_IN), jnp.float32)
    out2 = jax.block_until_ready(attribute_outputs_forward(x2, w1, b1, w2, b2))
    ref2 = _reference(x2, w1, b1, w2, b2)
    assert out2.shape == (10, NUM_CLASSES)
    assert jnp.allclose(out2, ref2, atol=1e-3), "mismatch vs reference (case 2)"

    # Case 3: multi-step grid with a ragged last block (no full-array padding).
    x3 = jax.random.normal(kx3, (602, DIM_IN), jnp.float32)
    out3 = jax.block_until_ready(
        attribute_outputs_forward(x3, w1, b1, w2, b2, tile_n=512))
    ref3 = _reference(x3, w1, b1, w2, b2)
    assert out3.shape == (602, NUM_CLASSES)
    assert jnp.allclose(out3, ref3, atol=1e-3), "mismatch vs reference (case 3)"

    # TODO(synk): detectron_weight_mapping is checkpoint metadata only (no compute).
    print("KERNEL_OK")
</pallas_src>

<mosaic_0001>
module attributes {stable_mosaic.version = 11 : i64} {
  func.func @_attribute_kernel(%arg0: i32, %arg1: memref<128x128xf32, #tpu.memory_space<vmem>>, %arg2: memref<128x512xf32, #tpu.memory_space<vmem>>, %arg3: memref<1x512xf32, #tpu.memory_space<vmem>>, %arg4: memref<8x128xf32, #tpu.memory_space<vmem>>, %arg5: memref<8x1xf32, #tpu.memory_space<vmem>>, %arg6: memref<4x8x128xf32, #tpu.memory_space<vmem>>) attributes {dimension_semantics = [#tpu.dimension_semantics<parallel>], iteration_bounds = array<i64: 1>, scalar_prefetch = 0 : i64, scratch_operands = 0 : i64, tpu.core_type = #tpu.core_type<tc>, window_params = [{transform_indices = @transform_0, window_bounds = array<i64: 128, 128>}, {pipeline_mode = #tpu.pipeline_mode<synchronous>, transform_indices = @transform_1, window_bounds = array<i64: 128, 512>}, {pipeline_mode = #tpu.pipeline_mode<synchronous>, transform_indices = @transform_2, window_bounds = array<i64: 1, 512>}, {pipeline_mode = #tpu.pipeline_mode<synchronous>, transform_indices = @transform_3, window_bounds = array<i64: 8, 128>}, {pipeline_mode = #tpu.pipeline_mode<synchronous>, transform_indices = @transform_4, window_bounds = array<i64: 8, 1>}, {transform_indices = @transform_5, window_bounds = array<i64: 4, 8, 128>}]} {
    %c0 = arith.constant 0 : index
    %c0_0 = arith.constant 0 : index
    %0 = vector.load %arg1[%c0, %c0_0] : memref<128x128xf32, #tpu.memory_space<vmem>>, vector<128x128xf32>
    %c0_1 = arith.constant 0 : index
    %c0_2 = arith.constant 0 : index
    %1 = vector.load %arg2[%c0_1, %c0_2] : memref<128x512xf32, #tpu.memory_space<vmem>>, vector<128x512xf32>
    %cst = arith.constant dense<0.000000e+00> : vector<128x512xf32>
    %2 = tpu.matmul %0, %1, %cst {dimension_numbers = #tpu.dot_dimension_numbers<[1], [0], [0], [1], [0, 0, 1, 1], [], []>} : vector<128x128xf32>, vector<128x512xf32>, vector<128x512xf32> -> vector<128x512xf32>
    %c0_3 = arith.constant 0 : index
    %c0_4 = arith.constant 0 : index
    %3 = vector.load %arg3[%c0_3, %c0_4] : memref<1x512xf32, #tpu.memory_space<vmem>>, vector<1x512xf32>
    %4 = vector.broadcast %3 : vector<1x512xf32> to vector<128x512xf32>
    %5 = arith.addf %2, %4 : vector<128x512xf32>
    %cst_5 = arith.constant 0.000000e+00 : f32
    %6 = vector.broadcast %cst_5 : f32 to vector<128x512xf32>
    %7 = arith.maximumf %5, %6 : vector<128x512xf32>
    %c0_6 = arith.constant 0 : index
    %c0_7 = arith.constant 0 : index
    %8 = vector.load %arg4[%c0_6, %c0_7] : memref<8x128xf32, #tpu.memory_space<vmem>>, vector<8x128xf32>
    %c0_8 = arith.constant 0 : index
    %c0_9 = arith.constant 0 : index
    %9 = vector.load %arg5[%c0_8, %c0_9] : memref<8x1xf32, #tpu.memory_space<vmem>>, vector<8x1xf32>
    %10 = vector.extract_strided_slice %7 {offsets = [0, 0], sizes = [128, 128], strides = [1, 1]} : vector<128x512xf32> to vector<128x128xf32>
    %cst_10 = arith.constant dense<0.000000e+00> : vector<8x128xf32>
    %11 = tpu.matmul %8, %10, %cst_10 {dimension_numbers = #tpu.dot_dimension_numbers<[1], [1], [0], [0], [0, 0, 1, 0], [], []>} : vector<8x128xf32>, vector<128x128xf32>, vector<8x128xf32> -> vector<8x128xf32>
    %12 = vector.broadcast %9 : vector<8x1xf32> to vector<8x128xf32>
    %13 = arith.addf %11, %12 : vector<8x128xf32>
    %cst_11 = arith.constant dense<0xFF800000> : vector<128xf32>
    %14 = vector.multi_reduction <maximumf>, %13, %cst_11 [0] : vector<8x128xf32> to vector<128xf32>
    %15 = vector.shape_cast %14 : vector<128xf32> to vector<1x128xf32>
    %16 = vector.broadcast %15 : vector<1x128xf32> to vector<8x128xf32>
    %17 = arith.subf %13, %16 : vector<8x128xf32>
    %18 = math.exp %17 : vector<8x128xf32>
    %cst_12 = arith.constant dense<0.000000e+00> : vector<128xf32>
    %19 = vector.multi_reduction <add>, %18, %cst_12 [0] : vector<8x128xf32> to vector<128xf32>
    %20 = vector.shape_cast %19 : vector<128xf32> to vector<1x128xf32>
    %21 = vector.broadcast %20 : vector<1x128xf32> to vector<8x128xf32>
    %22 = arith.divf %18, %21 : vector<8x128xf32>
    %c0_13 = arith.constant 0 : index
    %c0_14 = arith.constant 0 : index
    %c0_15 = arith.constant 0 : index
    %23 = vector.load %arg6[%c0_13, %c0_14, %c0_15] : memref<4x8x128xf32, #tpu.memory_space<vmem>>, vector<1x8x128xf32>
    %24 = vector.shape_cast %23 : vector<1x8x128xf32> to vector<8x128xf32>
    %25 = vector.shape_cast %22 : vector<8x128xf32> to vector<1x8x128xf32>
    tpu.vector_store %arg6[%c0_13, %c0_14, %c0_15], %25 {strides = array<i32>} : memref<4x8x128xf32, #tpu.memory_space<vmem>>, vector<1x8x128xf32>,
    %26 = vector.extract_strided_slice %7 {offsets = [0, 128], sizes = [128, 128], strides = [1, 1]} : vector<128x512xf32> to vector<128x128xf32>
    %cst_16 = arith.constant dense<0.000000e+00> : vector<8x128xf32>
    %27 = tpu.matmul %8, %26, %cst_16 {dimension_numbers = #tpu.dot_dimension_numbers<[1], [1], [0], [0], [0, 0, 1, 0], [], []>} : vector<8x128xf32>, vector<128x128xf32>, vector<8x128xf32> -> vector<8x128xf32>
    %28 = vector.broadcast %9 : vector<8x1xf32> to vector<8x128xf32>
    %29 = arith.addf %27, %28 : vector<8x128xf32>
    %cst_17 = arith.constant dense<0xFF800000> : vector<128xf32>
    %30 = vector.multi_reduction <maximumf>, %29, %cst_17 [0] : vector<8x128xf32> to vector<128xf32>
    %31 = vector.shape_cast %30 : vector<128xf32> to vector<1x128xf32>
    %32 = vector.broadcast %31 : vector<1x128xf32> to vector<8x128xf32>
    %33 = arith.subf %29, %32 : vector<8x128xf32>
    %34 = math.exp %33 : vector<8x128xf32>
    %cst_18 = arith.constant dense<0.000000e+00> : vector<128xf32>
    %35 = vector.multi_reduction <add>, %34, %cst_18 [0] : vector<8x128xf32> to vector<128xf32>
    %36 = vector.shape_cast %35 : vector<128xf32> to vector<1x128xf32>
    %37 = vector.broadcast %36 : vector<1x128xf32> to vector<8x128xf32>
    %38 = arith.divf %34, %37 : vector<8x128xf32>
    %c1 = arith.constant 1 : index
    %c0_19 = arith.constant 0 : index
    %c0_20 = arith.constant 0 : index
    %39 = vector.load %arg6[%c1, %c0_19, %c0_20] : memref<4x8x128xf32, #tpu.memory_space<vmem>>, vector<1x8x128xf32>
    %40 = vector.shape_cast %39 : vector<1x8x128xf32> to vector<8x128xf32>
    %41 = vector.shape_cast %38 : vector<8x128xf32> to vector<1x8x128xf32>
    tpu.vector_store %arg6[%c1, %c0_19, %c0_20], %41 {strides = array<i32>} : memref<4x8x128xf32, #tpu.memory_space<vmem>>, vector<1x8x128xf32>,
    %42 = vector.extract_strided_slice %7 {offsets = [0, 256], sizes = [128, 128], strides = [1, 1]} : vector<128x512xf32> to vector<128x128xf32>
    %cst_21 = arith.constant dense<0.000000e+00> : vector<8x128xf32>
    %43 = tpu.matmul %8, %42, %cst_21 {dimension_numbers = #tpu.dot_dimension_numbers<[1], [1], [0], [0], [0, 0, 1, 0], [], []>} : vector<8x128xf32>, vector<128x128xf32>, vector<8x128xf32> -> vector<8x128xf32>
    %44 = vector.broadcast %9 : vector<8x1xf32> to vector<8x128xf32>
    %45 = arith.addf %43, %44 : vector<8x128xf32>
    %cst_22 = arith.constant dense<0xFF800000> : vector<128xf32>
    %46 = vector.multi_reduction <maximumf>, %45, %cst_22 [0] : vector<8x128xf32> to vector<128xf32>
    %47 = vector.shape_cast %46 : vector<128xf32> to vector<1x128xf32>
    %48 = vector.broadcast %47 : vector<1x128xf32> to vector<8x128xf32>
    %49 = arith.subf %45, %48 : vector<8x128xf32>
    %50 = math.exp %49 : vector<8x128xf32>
    %cst_23 = arith.constant dense<0.000000e+00> : vector<128xf32>
    %51 = vector.multi_reduction <add>, %50, %cst_23 [0] : vector<8x128xf32> to vector<128xf32>
    %52 = vector.shape_cast %51 : vector<128xf32> to vector<1x128xf32>
    %53 = vector.broadcast %52 : vector<1x128xf32> to vector<8x128xf32>
    %54 = arith.divf %50, %53 : vector<8x128xf32>
    %c2 = arith.constant 2 : index
    %c0_24 = arith.constant 0 : index
    %c0_25 = arith.constant 0 : index
    %55 = vector.load %arg6[%c2, %c0_24, %c0_25] : memref<4x8x128xf32, #tpu.memory_space<vmem>>, vector<1x8x128xf32>
    %56 = vector.shape_cast %55 : vector<1x8x128xf32> to vector<8x128xf32>
    %57 = vector.shape_cast %54 : vector<8x128xf32> to vector<1x8x128xf32>
    tpu.vector_store %arg6[%c2, %c0_24, %c0_25], %57 {strides = array<i32>} : memref<4x8x128xf32, #tpu.memory_space<vmem>>, vector<1x8x128xf32>,
    %58 = vector.extract_strided_slice %7 {offsets = [0, 384], sizes = [128, 128], strides = [1, 1]} : vector<128x512xf32> to vector<128x128xf32>
    %cst_26 = arith.constant dense<0.000000e+00> : vector<8x128xf32>
    %59 = tpu.matmul %8, %58, %cst_26 {dimension_numbers = #tpu.dot_dimension_numbers<[1], [1], [0], [0], [0, 0, 1, 0], [], []>} : vector<8x128xf32>, vector<128x128xf32>, vector<8x128xf32> -> vector<8x128xf32>
    %60 = vector.broadcast %9 : vector<8x1xf32> to vector<8x128xf32>
    %61 = arith.addf %59, %60 : vector<8x128xf32>
    %cst_27 = arith.constant dense<0xFF800000> : vector<128xf32>
    %62 = vector.multi_reduction <maximumf>, %61, %cst_27 [0] : vector<8x128xf32> to vector<128xf32>
    %63 = vector.shape_cast %62 : vector<128xf32> to vector<1x128xf32>
    %64 = vector.broadcast %63 : vector<1x128xf32> to vector<8x128xf32>
    %65 = arith.subf %61, %64 : vector<8x128xf32>
    %66 = math.exp %65 : vector<8x128xf32>
    %cst_28 = arith.constant dense<0.000000e+00> : vector<128xf32>
    %67 = vector.multi_reduction <add>, %66, %cst_28 [0] : vector<8x128xf32> to vector<128xf32>
    %68 = vector.shape_cast %67 : vector<128xf32> to vector<1x128xf32>
    %69 = vector.broadcast %68 : vector<1x128xf32> to vector<8x128xf32>
    %70 = arith.divf %66, %69 : vector<8x128xf32>
    %c3 = arith.constant 3 : index
    %c0_29 = arith.constant 0 : index
    %c0_30 = arith.constant 0 : index
    %71 = vector.load %arg6[%c3, %c0_29, %c0_30] : memref<4x8x128xf32, #tpu.memory_space<vmem>>, vector<1x8x128xf32>
    %72 = vector.shape_cast %71 : vector<1x8x128xf32> to vector<8x128xf32>
    %73 = vector.shape_cast %70 : vector<8x128xf32> to vector<1x8x128xf32>
    tpu.vector_store %arg6[%c3, %c0_29, %c0_30], %73 {strides = array<i32>} : memref<4x8x128xf32, #tpu.memory_space<vmem>>, vector<1x8x128xf32>,
    return
  }
  func.func @transform_0(%arg0: i32) -> (i32, i32) {
    %c0_i32 = arith.constant 0 : i32
    %c0_i32_0 = arith.constant 0 : i32
    return %arg0, %c0_i32 : i32, i32
  }
  func.func @transform_1(%arg0: i32) -> (i32, i32) {
    %c0_i32 = arith.constant 0 : i32
    %c0_i32_0 = arith.constant 0 : i32
    %c0_i32_1 = arith.constant 0 : i32
    return %c0_i32, %c0_i32_0 : i32, i32
  }
  func.func @transform_2(%arg0: i32) -> (i32, i32) {
    %c0_i32 = arith.constant 0 : i32
    %c0_i32_0 = arith.constant 0 : i32
    %c0_i32_1 = arith.constant 0 : i32
    return %c0_i32, %c0_i32_0 : i32, i32
  }
  func.func @transform_3(%arg0: i32) -> (i32, i32) {
    %c0_i32 = arith.constant 0 : i32
    %c0_i32_0 = arith.constant 0 : i32
    %c0_i32_1 = arith.constant 0 : i32
    return %c0_i32, %c0_i32_0 : i32, i32
  }
  func.func @transform_4(%arg0: i32) -> (i32, i32) {
    %c0_i32 = arith.constant 0 : i32
    %c0_i32_0 = arith.constant 0 : i32
    %c0_i32_1 = arith.constant 0 : i32
    return %c0_i32, %c0_i32_0 : i32, i32
  }
  func.func @transform_5(%arg0: i32) -> (i32, i32, i32) {
    %c0_i32 = arith.constant 0 : i32
    %c0_i32_0 = arith.constant 0 : i32
    %c0_i32_1 = arith.constant 0 : i32
    return %c0_i32, %c0_i32_0, %arg0 : i32, i32, i32
  }
}

</mosaic_0001>

<llo_original>
// kernel: tpu_custom_call.1
$region0: #{tpu_custom_call.1}
  #allocation0 [shape = 'u32[]', space=smem, size = 0x4, offset = 0x4, fixed_abs, tag = 'smem constant byte address 0x4 - core index']
  #allocation1 [shape = 'u32[144,128]{1,0:T(1,128)}', space=vmem, size = 0x12000, scoped, tag = 'internal scratch']
  %s0 = inlined_call_operand.hbm [shape: f32[128,128], index: 0, kind: input, shape index: {}]
  %s1 = inlined_call_operand.hbm [shape: f32[128,512], index: 1, kind: input, shape index: {}]
  %s2 = inlined_call_operand.vmem [shape: f32[1,512], index: 2, kind: input, shape index: {}]
  %s3 = inlined_call_operand.vmem [shape: f32[8,128], index: 3, kind: input, shape index: {}]
  %s4 = inlined_call_operand.vmem [shape: f32[8,1], index: 4, kind: input, shape index: {}]
  %s5 = inlined_call_operand.hbm [shape: f32[4,8,128], index: 5, kind: output, shape index: {}]
  %s6 = sld [smem:[#allocation0]]
  $region38: #{tpu_custom_call.1} parent=0
    _
  %s8 = ssub.s32 1, %s6
  %s9 = scalar_select 0, %s8, %s6
  $region1: #{tpu_custom_call.1} parent=0
    #allocation2 [shape = 'u8[65536]{0}', space=vmem, size = 0x10000, scoped, tag = 'input window, operand 0, single buffered']
    #allocation3 [shape = 's32[1]{0}', space=sflag, size = 0x4, scoped, tag = 'scoped memory for tpu_custom_call.1']
    #allocation4 [shape = 's32[1]{0}', space=sflag, size = 0x4, scoped, tag = 'scoped memory for tpu_custom_call.1']
    #allocation5 [shape = 'u8[262144]{0}', space=vmem, size = 0x40000, scoped, tag = 'input window, operand 1, single buffered']
    #allocation6 [shape = 's32[1]{0}', space=sflag, size = 0x4, scoped, tag = 'scoped memory for tpu_custom_call.1']
    #allocation7 [shape = 'u8[16384]{0}', space=vmem, size = 0x4000, scoped, tag = 'output window, operand 0, single buffered']
    %10 = vsyncpa [#allocation3], 0
    %11 = vsyncpa [#allocation6], 0
    %12 = vsyncpa [#allocation4], 0
    // Predicated region
    $region2: #{tpu_custom_call.1} parent=1 // pred_check
      _
    $region3: #{tpu_custom_call.1} parent=1 // pred_check_branch
      %14 = sbr.rel (0) target = $region5
    $region4: #{tpu_custom_call.1} parent=1 // pred_region
      %s16 = ssub.s32 2048, 2048
      %17 = vsyncadd [#allocation3], %s16
      %s18 = sshll.u32 [#allocation2], 4
      %s19 = int_to_ptr.vmem [resolvable:$true] %s18
      %24 = dma.hbm_to_vmem [thread:$0]  %s0, 2048, %s19, [#allocation3], 128, 128, 8
    $region5: #{tpu_custom_call.1} parent=1 // pred_fallthru
      _
    // Predicated region
    $region6: #{tpu_custom_call.1} parent=1 // pred_check
      _
    $region7: #{tpu_custom_call.1} parent=1 // pred_check_branch
      %26 = sbr.rel (0) target = $region9
    $region8: #{tpu_custom_call.1} parent=1 // pred_region
      %s28 = ssub.s32 8192, 8192
      %29 = vsyncadd [#allocation6], %s28
      %s30 = sshll.u32 [#allocation5], 4
      %s31 = int_to_ptr.vmem [resolvable:$true] %s30
      %36 = dma.hbm_to_vmem [thread:$0]  %s1, 8192, %s31, [#allocation6], 512, 512, 32
    $region9: #{tpu_custom_call.1} parent=1 // pred_fallthru
      _
    // Predicated region
    $region10: #{tpu_custom_call.1} parent=1 // pred_check
      _
    $region11: #{tpu_custom_call.1} parent=1 // pred_check_branch
      %38 = sbr.rel (0) target = $region13
    $region12: #{tpu_custom_call.1} parent=1 // pred_region
      _
    $region13: #{tpu_custom_call.1} parent=1 // pred_fallthru
      _
    // Predicated region
    $region14: #{tpu_custom_call.1} parent=1 // pred_check
      _
    $region15: #{tpu_custom_call.1} parent=1 // pred_check_branch
      %40 = sbr.rel (0) target = $region17
    $region16: #{tpu_custom_call.1} parent=1 // pred_region
      _
    $region17: #{tpu_custom_call.1} parent=1 // pred_fallthru
      _
    // Predicated region
    $region18: #{tpu_custom_call.1} parent=1 // pred_check
      _
    $region19: #{tpu_custom_call.1} parent=1 // pred_check_branch
      %42 = sbr.rel (0) target = $region21
    $region20: #{tpu_custom_call.1} parent=1 // pred_region
      _
    $region21: #{tpu_custom_call.1} parent=1 // pred_fallthru
      _
    // Predicated region
    $region22: #{tpu_custom_call.1} parent=1 // pred_check
      _
    $region23: #{tpu_custom_call.1} parent=1 // pred_check_branch
      %44 = sbr.rel (0) target = $region25
    $region24: #{tpu_custom_call.1} parent=1 // pred_region
      %45 = dma.done [#allocation3], 2048
    $region25: #{tpu_custom_call.1} parent=1 // pred_fallthru
      _
    // Predicated region
    $region26: #{tpu_custom_call.1} parent=1 // pred_check
      _
    $region27: #{tpu_custom_call.1} parent=1 // pred_check_branch
      %47 = sbr.rel (0) target = $region29
    $region28: #{tpu_custom_call.1} parent=1 // pred_region
      %48 = dma.done [#allocation6], 8192
    $region29: #{tpu_custom_call.1} parent=1 // pred_fallthru
      _
    %v49 = vld [vmem:[#allocation2] sm:$0xff]
    %v50 = vld [vmem:[#allocation2 + $0x8] sm:$0xff]
    %v51 = vld [vmem:[#allocation2 + $0x10] sm:$0xff]
    %v52 = vld [vmem:[#allocation2 + $0x18] sm:$0xff]
    %v53 = vld [vmem:[#allocation2 + $0x20] sm:$0xff]
    %v54 = vld [vmem:[#allocation2 + $0x28] sm:$0xff]
    %v55 = vld [vmem:[#allocation2 + $0x30] sm:$0xff]
    %v56 = vld [vmem:[#allocation2 + $0x38] sm:$0xff]
    %v57 = vld [vmem:[#allocation2 + $0x40] sm:$0xff]
    %v58 = vld [vmem:[#allocation2 + $0x48] sm:$0xff]
    %v59 = vld [vmem:[#allocation2 + $0x50] sm:$0xff]
    %v60 = vld [vmem:[#allocation2 + $0x58] sm:$0xff]
    %v61 = vld [vmem:[#allocation2 + $0x60] sm:$0xff]
    %v62 = vld [vmem:[#allocation2 + $0x68] sm:$0xff]
    %v63 = vld [vmem:[#allocation2 + $0x70] sm:$0xff]
    %v64 = vld [vmem:[#allocation2 + $0x78] sm:$0xff]
    %v65 = vld [vmem:[#allocation5] sm:$0xff]
    %v66 = vld [vmem:[#allocation5 + $0x8] sm:$0xff]
    %v67 = vld [vmem:[#allocation5 + $0x10] sm:$0xff]
    %v68 = vld [vmem:[#allocation5 + $0x18] sm:$0xff]
    %v69 = vld [vmem:[#allocation5 + $0x20] sm:$0xff]
    %v70 = vld [vmem:[#allocation5 + $0x28] sm:$0xff]
    %v71 = vld [vmem:[#allocation5 + $0x30] sm:$0xff]
    %v72 = vld [vmem:[#allocation5 + $0x38] sm:$0xff]
    %v73 = vld [vmem:[#allocation5 + $0x40] sm:$0xff]
    %v74 = vld [vmem:[#allocation5 + $0x48] sm:$0xff]
    %v75 = vld [vmem:[#allocation5 + $0x50] sm:$0xff]
    %v76 = vld [vmem:[#allocation5 + $0x58] sm:$0xff]
    %v77 = vld [vmem:[#allocation5 + $0x60] sm:$0xff]
    %v78 = vld [vmem:[#allocation5 + $0x68] sm:$0xff]
    %v79 = vld [vmem:[#allocation5 + $0x70] sm:$0xff]
    %v80 = vld [vmem:[#allocation5 + $0x78] sm:$0xff]
    %v81 = vld [vmem:[#allocation5 + $0x80] sm:$0xff]
    %v82 = vld [vmem:[#allocation5 + $0x88] sm:$0xff]
    %v83 = vld [vmem:[#allocation5 + $0x90] sm:$0xff]
    %v84 = vld [vmem:[#allocation5 + $0x98] sm:$0xff]
    %v85 = vld [vmem:[#allocation5 + $0xa0] sm:$0xff]
    %v86 = vld [vmem:[#allocation5 + $0xa8] sm:$0xff]
    %v87 = vld [vmem:[#allocation5 + $0xb0] sm:$0xff]
    %v88 = vld [vmem:[#allocation5 + $0xb8] sm:$0xff]
    %v89 = vld [vmem:[#allocation5 + $0xc0] sm:$0xff]
    %v90 = vld [vmem:[#allocation5 + $0xc8] sm:$0xff]
    %v91 = vld [vmem:[#allocation5 + $0xd0] sm:$0xff]
    %v92 = vld [vmem:[#allocation5 + $0xd8] sm:$0xff]
    %v93 = vld [vmem:[#allocation5 + $0xe0] sm:$0xff]
    %v94 = vld [vmem:[#allocation5 + $0xe8] sm:$0xff]
    %v95 = vld [vmem:[#allocation5 + $0xf0] sm:$0xff]
    %v96 = vld [vmem:[#allocation5 + $0xf8] sm:$0xff]
    %v97 = vld [vmem:[#allocation5 + $0x100] sm:$0xff]
    %v98 = vld [vmem:[#allocation5 + $0x108] sm:$0xff]
    %v99 = vld [vmem:[#allocation5 + $0x110] sm:$0xff]
    %v100 = vld [vmem:[#allocation5 + $0x118] sm:$0xff]
    %v101 = vld [vmem:[#allocation5 + $0x120] sm:$0xff]
    %v102 = vld [vmem:[#allocation5 + $0x128] sm:$0xff]
    %v103 = vld [vmem:[#allocation5 + $0x130] sm:$0xff]
    %v104 = vld [vmem:[#allocation5 + $0x138] sm:$0xff]
    %v105 = vld [vmem:[#allocation5 + $0x140] sm:$0xff]
    %v106 = vld [vmem:[#allocation5 + $0x148] sm:$0xff]
    %v107 = vld [vmem:[#allocation5 + $0x150] sm:$0xff]
    %v108 = vld [vmem:[#allocation5 + $0x158] sm:$0xff]
    %v109 = vld [vmem:[#allocation5 + $0x160] sm:$0xff]
    %v110 = vld [vmem:[#allocation5 + $0x168] sm:$0xff]
    %v111 = vld [vmem:[#allocation5 + $0x170] sm:$0xff]
    %v112 = vld [vmem:[#allocation5 + $0x178] sm:$0xff]
    %v113 = vld [vmem:[#allocation5 + $0x180] sm:$0xff]
    %v114 = vld [vmem:[#allocation5 + $0x188] sm:$0xff]
    %v115 = vld [vmem:[#allocation5 + $0x190] sm:$0xff]
    %v116 = vld [vmem:[#allocation5 + $0x198] sm:$0xff]
    %v117 = vld [vmem:[#allocation5 + $0x1a0] sm:$0xff]
    %v118 = vld [vmem:[#allocation5 + $0x1a8] sm:$0xff]
    %v119 = vld [vmem:[#allocation5 + $0x1b0] sm:$0xff]
    %v120 = vld [vmem:[#allocation5 + $0x1b8] sm:$0xff]
    %v121 = vld [vmem:[#allocation5 + $0x1c0] sm:$0xff]
    %v122 = vld [vmem:[#allocation5 + $0x1c8] sm:$0xff]
    %v123 = vld [vmem:[#allocation5 + $0x1d0] sm:$0xff]
    %v124 = vld [vmem:[#allocation5 + $0x1d8] sm:$0xff]
    %v125 = vld [vmem:[#allocation5 + $0x1e0] sm:$0xff]
    %v126 = vld [vmem:[#allocation5 + $0x1e8] sm:$0xff]
    %v127 = vld [vmem:[#allocation5 + $0x1f0] sm:$0xff]
    %v128 = vld [vmem:[#allocation5 + $0x1f8] sm:$0xff]
    %v129 = vld [vmem:[%s2] sm:$0xf]
    %v131 = vlaneseq
    %v132 = vshrl.u32 %v131, 7
    %v133 = vsub.s32 0, %v132
    %v134 = vrot.slane %v129, %v133
    %v135 = vlaneseq
    %v136 = vshrl.u32 %v135, 7
    %v137 = vsub.s32 1, %v136
    %v138 = vrot.slane %v129, %v137
    %v139 = vlaneseq
    %v140 = vshrl.u32 %v139, 7
    %v141 = vsub.s32 2, %v140
    %v142 = vrot.slane %v129, %v141
    %v143 = vlaneseq
    %v144 = vshrl.u32 %v143, 7
    %v145 = vsub.s32 3, %v144
    %v146 = vrot.slane %v129, %v145
    %151 = vmatprep.subr.mxu0 %v126
    %152 = vmatpush1.msra.mxu0 %v125
    %153 = vmatprep.subr.mxu0 %v122
    %154 = vmatpush1.msra.mxu0 %v121
    %155 = vmatprep.subr.mxu0 %v118
    %156 = vmatpush1.msra.mxu0 %v117
    %157 = vmatprep.subr.mxu0 %v114
    %158 = vmatpush1.msra.mxu0 %v113
    %159 = vmatprep.subr.mxu0 %v110
    %160 = vmatpush1.msra.mxu0 %v109
    %161 = vmatprep.subr.mxu0 %v106
    %162 = vmatpush1.msra.mxu0 %v105
    %163 = vmatprep.subr.mxu0 %v102
    %164 = vmatpush1.msra.mxu0 %v101
    %165 = vmatprep.subr.mxu0 %v98
    %166 = vmatpush1.msra.mxu0 %v97
    %167 = vmatprep.subr.mxu0 %v94
    %168 = vmatpush1.msra.mxu0 %v93
    %169 = vmatprep.subr.mxu0 %v90
    %170 = vmatpush1.msra.mxu0 %v89
    %171 = vmatprep.subr.mxu0 %v86
    %172 = vmatpush1.msra.mxu0 %v85
    %173 = vmatprep.subr.mxu0 %v82
    %174 = vmatpush1.msra.mxu0 %v81
    %175 = vmatprep.subr.mxu0 %v78
    %176 = vmatpush1.msra.mxu0 %v77
    %177 = vmatprep.subr.mxu0 %v74
    %178 = vmatpush1.msra.mxu0 %v73
    %179 = vmatprep.subr.mxu0 %v70
    %180 = vmatpush1.msra.mxu0 %v69
    %181 = vmatprep.subr.mxu0 %v66
    %182 = vmatpush1.msra.mxu0 %v65
    %183 = vmatprep.subr.mxu0 0.0
    %184 = vmatpush2.msra.mxu0 0.0
    %185 = vmatprep.subr.mxu0 0.0
    %186 = vmatpush2.msra.mxu0 0.0
    %187 = vmatprep.subr.mxu0 0.0
    %188 = vmatpush2.msra.mxu0 0.0
    %189 = vmatprep.subr.mxu0 0.0
    %190 = vmatpush2.msra.mxu0 0.0
    %191 = vmatprep.subr.mxu0 0.0
    %192 = vmatpush2.msra.mxu0 0.0
    %193 = vmatprep.subr.mxu0 0.0
    %194 = vmatpush2.msra.mxu0 0.0
    %195 = vmatprep.subr.mxu0 0.0
    %196 = vmatpush2.msra.mxu0 0.0
    %197 = vmatprep.subr.mxu0 0.0
    %198 = vmatpush2.msra.mxu0 0.0
    %199 = vmatprep.subr.mxu0 0.0
    %200 = vmatpush2.msra.mxu0 0.0
    %201 = vmatprep.subr.mxu0 0.0
    %202 = vmatpush2.msra.mxu0 0.0
    %203 = vmatprep.subr.mxu0 0.0
    %204 = vmatpush2.msra.mxu0 0.0
    %205 = vmatprep.subr.mxu0 0.0
    %206 = vmatpush2.msra.mxu0 0.0
    %207 = vmatprep.subr.mxu0 0.0
    %208 = vmatpush2.msra.mxu0 0.0
    %209 = vmatprep.subr.mxu0 0.0
    %210 = vmatpush2.msra.mxu0 0.0
    %211 = vmatprep.subr.mxu0 0.0
    %212 = vmatpush2.msra.mxu0 0.0
    %213 = vmatprep.subr.mxu0 0.0
    %214 = vmatpush2.msra.mxu0 0.0
    %215 = vmatprep.mubr.f32.mxu0 0.0
    %216 = vmatmul.mubr.f32.gmra.mxu0 %v49
    %v217 = vpop.f32.mrf.mxu0
    %v218 = vadd.f32 %v134, %v217
    %v219 = vpop.f32.mrf.mxu0
    %v220 = vadd.f32 %v138, %v219
    %221 = vmatprep.mubr.f32.mxu0 0.0
    %222 = vmatmul.mubr.f32.gmra.mxu0 %v50
    %v223 = vpop.f32.mrf.mxu0
    %v224 = vadd.f32 %v134, %v223
    %v225 = vpop.f32.mrf.mxu0
    %v226 = vadd.f32 %v138, %v225
    %227 = vmatprep.mubr.f32.mxu0 0.0
    %228 = vmatmul.mubr.f32.gmra.mxu0 %v51
    %v229 = vpop.f32.mrf.mxu0
    %v230 = vadd.f32 %v134, %v229
    %v231 = vpop.f32.mrf.mxu0
    %v232 = vadd.f32 %v138, %v231
    %233 = vmatprep.mubr.f32.mxu0 0.0
    %234 = vmatmul.mubr.f32.gmra.mxu0 %v52
    %v235 = vpop.f32.mrf.mxu0
    %v236 = vadd.f32 %v134, %v235
    %v237 = vpop.f32.mrf.mxu0
    %v238 = vadd.f32 %v138, %v237
    %239 = vmatprep.mubr.f32.mxu0 0.0
    %240 = vmatmul.mubr.f32.gmra.mxu0 %v53
    %v241 = vpop.f32.mrf.mxu0
    %v242 = vadd.f32 %v134, %v241
    %v243 = vpop.f32.mrf.mxu0
    %v244 = vadd.f32 %v138, %v243
    %245 = vmatprep.mubr.f32.mxu0 0.0
    %246 = vmatmul.mubr.f32.gmra.mxu0 %v54
    %v247 = vpop.f32.mrf.mxu0
    %v248 = vadd.f32 %v134, %v247
    %v249 = vpop.f32.mrf.mxu0
    %v250 = vadd.f32 %v138, %v249
    %251 = vmatprep.mubr.f32.mxu0 0.0
    %252 = vmatmul.mubr.f32.gmra.mxu0 %v55
    %v253 = vpop.f32.mrf.mxu0
    %v254 = vadd.f32 %v134, %v253
    %v255 = vpop.f32.mrf.mxu0
    %v256 = vadd.f32 %v138, %v255
    %257 = vmatprep.mubr.f32.mxu0 0.0
    %258 = vmatmul.mubr.f32.gmra.mxu0 %v56
    %v259 = vpop.f32.mrf.mxu0
    %v260 = vadd.f32 %v134, %v259
    %v261 = vpop.f32.mrf.mxu0
    %v262 = vadd.f32 %v138, %v261
    %263 = vmatprep.mubr.f32.mxu0 0.0
    %264 = vmatmul.mubr.f32.gmra.mxu0 %v57
    %v265 = vpop.f32.mrf.mxu0
    %v266 = vadd.f32 %v134, %v265
    %v267 = vpop.f32.mrf.mxu0
    %v268 = vadd.f32 %v138, %v267
    %269 = vmatprep.mubr.f32.mxu0 0.0
    %270 = vmatmul.mubr.f32.gmra.mxu0 %v58
    %v271 = vpop.f32.mrf.mxu0
    %v272 = vadd.f32 %v134, %v271
    %v273 = vpop.f32.mrf.mxu0
    %v274 = vadd.f32 %v138, %v273
    %275 = vmatprep.mubr.f32.mxu0 0.0
    %276 = vmatmul.mubr.f32.gmra.mxu0 %v59
    %v277 = vpop.f32.mrf.mxu0
    %v278 = vadd.f32 %v134, %v277
    %v279 = vpop.f32.mrf.mxu0
    %v280 = vadd.f32 %v138, %v279
    %281 = vmatprep.mubr.f32.mxu0 0.0
    %282 = vmatmul.mubr.f32.gmra.mxu0 %v60
    %v283 = vpop.f32.mrf.mxu0
    %v284 = vadd.f32 %v134, %v283
    %v285 = vpop.f32.mrf.mxu0
    %v286 = vadd.f32 %v138, %v285
    %287 = vmatprep.mubr.f32.mxu0 0.0
    %288 = vmatmul.mubr.f32.gmra.mxu0 %v61
    %v289 = vpop.f32.mrf.mxu0
    %v290 = vadd.f32 %v134, %v289
    %v291 = vpop.f32.mrf.mxu0
    %v292 = vadd.f32 %v138, %v291
    %293 = vmatprep.mubr.f32.mxu0 0.0
    %294 = vmatmul.mubr.f32.gmra.mxu0 %v62
    %v295 = vpop.f32.mrf.mxu0
    %v296 = vadd.f32 %v134, %v295
    %v297 = vpop.f32.mrf.mxu0
    %v298 = vadd.f32 %v138, %v297
    %299 = vmatprep.mubr.f32.mxu0 0.0
    %300 = vmatmul.mubr.f32.gmra.mxu0 %v63
    %v301 = vpop.f32.mrf.mxu0
    %v302 = vadd.f32 %v134, %v301
    %v303 = vpop.f32.mrf.mxu0
    %v304 = vadd.f32 %v138, %v303
    %305 = vmatprep.mubr.f32.mxu0 0.0
    %306 = vmatmul.mubr.f32.gmra.mxu0 %v64
    %v307 = vpop.f32.mrf.mxu0
    %v308 = vadd.f32 %v134, %v307
    %v309 = vpop.f32.mrf.mxu0
    %v310 = vadd.f32 %v138, %v309
    %311 = vdwg.mxu0
    %312 = vmatprep.subr.mxu0 %v128
    %313 = vmatpush1.msra.mxu0 %v127
    %314 = vmatprep.subr.mxu0 %v124
    %315 = vmatpush1.msra.mxu0 %v123
    %316 = vmatprep.subr.mxu0 %v120
    %317 = vmatpush1.msra.mxu0 %v119
    %318 = vmatprep.subr.mxu0 %v116
    %319 = vmatpush1.msra.mxu0 %v115
    %320 = vmatprep.subr.mxu0 %v112
    %321 = vmatpush1.msra.mxu0 %v111
    %322 = vmatprep.subr.mxu0 %v108
    %323 = vmatpush1.msra.mxu0 %v107
    %324 = vmatprep.subr.mxu0 %v104
    %325 = vmatpush1.msra.mxu0 %v103
    %326 = vmatprep.subr.mxu0 %v100
    %327 = vmatpush1.msra.mxu0 %v99
    %328 = vmatprep.subr.mxu0 %v96
    %329 = vmatpush1.msra.mxu0 %v95
    %330 = vmatprep.subr.mxu0 %v92
    %331 = vmatpush1.msra.mxu0 %v91
    %332 = vmatprep.subr.mxu0 %v88
    %333 = vmatpush1.msra.mxu0 %v87
    %334 = vmatprep.subr.mxu0 %v84
    %335 = vmatpush1.msra.mxu0 %v83
    %336 = vmatprep.subr.mxu0 %v80
    %337 = vmatpush1.msra.mxu0 %v79
    %338 = vmatprep.subr.mxu0 %v76
    %339 = vmatpush1.msra.mxu0 %v75
    %340 = vmatprep.subr.mxu0 %v72
    %341 = vmatpush1.msra.mxu0 %v71
    %342 = vmatprep.subr.mxu0 %v68
    %343 = vmatpush1.msra.mxu0 %v67
    %344 = vmatprep.subr.mxu0 0.0
    %345 = vmatpush2.msra.mxu0 0.0
    %346 = vmatprep.subr.mxu0 0.0
    %347 = vmatpush2.msra.mxu0 0.0
    %348 = vmatprep.subr.mxu0 0.0
    %349 = vmatpush2.msra.mxu0 0.0
    %350 = vmatprep.subr.mxu0 0.0
    %351 = vmatpush2.msra.mxu0 0.0
    %352 = vmatprep.subr.mxu0 0.0
    %353 = vmatpush2.msra.mxu0 0.0
    %354 = vmatprep.subr.mxu0 0.0
    %355 = vmatpush2.msra.mxu0 0.0
    %356 = vmatprep.subr.mxu0 0.0
    %357 = vmatpush2.msra.mxu0 0.0
    %358 = vmatprep.subr.mxu0 0.0
    %359 = vmatpush2.msra.mxu0 0.0
    %360 = vmatprep.subr.mxu0 0.0
    %361 = vmatpush2.msra.mxu0 0.0
    %362 = vmatprep.subr.mxu0 0.0
    %363 = vmatpush2.msra.mxu0 0.0
    %364 = vmatprep.subr.mxu0 0.0
    %365 = vmatpush2.msra.mxu0 0.0
    %366 = vmatprep.subr.mxu0 0.0
    %367 = vmatpush2.msra.mxu0 0.0
    %368 = vmatprep.subr.mxu0 0.0
    %369 = vmatpush2.msra.mxu0 0.0
    %370 = vmatprep.subr.mxu0 0.0
    %371 = vmatpush2.msra.mxu0 0.0
    %372 = vmatprep.subr.mxu0 0.0
    %373 = vmatpush2.msra.mxu0 0.0
    %374 = vmatprep.subr.mxu0 0.0
    %375 = vmatpush2.msra.mxu0 0.0
    %376 = vmatprep.mubr.f32.mxu0 0.0
    %377 = vmatmul.mubr.f32.gmra.mxu0 %v49
    %v378 = vpop.f32.mrf.mxu0
    %v379 = vadd.f32 %v142, %v378
    %v380 = vpop.f32.mrf.mxu0
    %v381 = vadd.f32 %v146, %v380
    %382 = vmatprep.mubr.f32.mxu0 0.0
    %383 = vmatmul.mubr.f32.gmra.mxu0 %v50
    %v384 = vpop.f32.mrf.mxu0
    %v385 = vadd.f32 %v142, %v384
    %v386 = vpop.f32.mrf.mxu0
    %v387 = vadd.f32 %v146, %v386
    %388 = vmatprep.mubr.f32.mxu0 0.0
    %389 = vmatmul.mubr.f32.gmra.mxu0 %v51
    %v390 = vpop.f32.mrf.mxu0
    %v391 = vadd.f32 %v142, %v390
    %v392 = vpop.f32.mrf.mxu0
    %v393 = vadd.f32 %v146, %v392
    %394 = vmatprep.mubr.f32.mxu0 0.0
    %395 = vmatmul.mubr.f32.gmra.mxu0 %v52
    %v396 = vpop.f32.mrf.mxu0
    %v397 = vadd.f32 %v142, %v396
    %v398 = vpop.f32.mrf.mxu0
    %v399 = vadd.f32 %v146, %v398
    %400 = vmatprep.mubr.f32.mxu0 0.0
    %401 = vmatmul.mubr.f32.gmra.mxu0 %v53
    %v402 = vpop.f32.mrf.mxu0
    %v403 = vadd.f32 %v142, %v402
    %v404 = vpop.f32.mrf.mxu0
    %v405 = vadd.f32 %v146, %v404
    %406 = vmatprep.mubr.f32.mxu0 0.0
    %407 = vmatmul.mubr.f32.gmra.mxu0 %v54
    %v408 = vpop.f32.mrf.mxu0
    %v409 = vadd.f32 %v142, %v408
    %v410 = vpop.f32.mrf.mxu0
    %v411 = vadd.f32 %v146, %v410
    %412 = vmatprep.mubr.f32.mxu0 0.0
    %413 = vmatmul.mubr.f32.gmra.mxu0 %v55
    %v414 = vpop.f32.mrf.mxu0
    %v415 = vadd.f32 %v142, %v414
    %v416 = vpop.f32.mrf.mxu0
    %v417 = vadd.f32 %v146, %v416
    %418 = vmatprep.mubr.f32.mxu0 0.0
    %419 = vmatmul.mubr.f32.gmra.mxu0 %v56
    %v420 = vpop.f32.mrf.mxu0
    %v421 = vadd.f32 %v142, %v420
    %v422 = vpop.f32.mrf.mxu0
    %v423 = vadd.f32 %v146, %v422
    %424 = vmatprep.mubr.f32.mxu0 0.0
    %425 = vmatmul.mubr.f32.gmra.mxu0 %v57
    %v426 = vpop.f32.mrf.mxu0
    %v427 = vadd.f32 %v142, %v426
    %v428 = vpop.f32.mrf.mxu0
    %v429 = vadd.f32 %v146, %v428
    %430 = vmatprep.mubr.f32.mxu0 0.0
    %431 = vmatmul.mubr.f32.gmra.mxu0 %v58
    %v432 = vpop.f32.mrf.mxu0
    %v433 = vadd.f32 %v142, %v432
    %v434 = vpop.f32.mrf.mxu0
    %v435 = vadd.f32 %v146, %v434
    %436 = vmatprep.mubr.f32.mxu0 0.0
    %437 = vmatmul.mubr.f32.gmra.mxu0 %v59
    %v438 = vpop.f32.mrf.mxu0
    %v439 = vadd.f32 %v142, %v438
    %v440 = vpop.f32.mrf.mxu0
    %v441 = vadd.f32 %v146, %v440
    %442 = vmatprep.mubr.f32.mxu0 0.0
    %443 = vmatmul.mubr.f32.gmra.mxu0 %v60
    %v444 = vpop.f32.mrf.mxu0
    %v445 = vadd.f32 %v142, %v444
    %v446 = vpop.f32.mrf.mxu0
    %v447 = vadd.f32 %v146, %v446
    %448 = vmatprep.mubr.f32.mxu0 0.0
    %449 = vmatmul.mubr.f32.gmra.mxu0 %v61
    %v450 = vpop.f32.mrf.mxu0
    %v451 = vadd.f32 %v142, %v450
    %v452 = vpop.f32.mrf.mxu0
    %v453 = vadd.f32 %v146, %v452
    %454 = vmatprep.mubr.f32.mxu0 0.0
    %455 = vmatmul.mubr.f32.gmra.mxu0 %v62
    %v456 = vpop.f32.mrf.mxu0
    %v457 = vadd.f32 %v142, %v456
    %v458 = vpop.f32.mrf.mxu0
    %v459 = vadd.f32 %v146, %v458
    %460 = vmatprep.mubr.f32.mxu0 0.0
    %461 = vmatmul.mubr.f32.gmra.mxu0 %v63
    %v462 = vpop.f32.mrf.mxu0
    %v463 = vadd.f32 %v142, %v462
    %v464 = vpop.f32.mrf.mxu0
    %v465 = vadd.f32 %v146, %v464
    %466 = vmatprep.mubr.f32.mxu0 0.0
    %467 = vmatmul.mubr.f32.gmra.mxu0 %v64
    %v468 = vpop.f32.mrf.mxu0
    %v469 = vadd.f32 %v142, %v468
    %v470 = vpop.f32.mrf.mxu0
    %v471 = vadd.f32 %v146, %v470
    %472 = vdwg.mxu0
    %v473 = vmax.f32 %v218, 0.0
    %v474 = vmax.f32 %v220, 0.0
    %v475 = vmax.f32 %v379, 0.0
    %v476 = vmax.f32 %v381, 0.0
    %v477 = vmax.f32 %v224, 0.0
    %v478 = vmax.f32 %v226, 0.0
    %v479 = vmax.f32 %v385, 0.0
    %v480 = vmax.f32 %v387, 0.0
    %v481 = vmax.f32 %v230, 0.0
    %v482 = vmax.f32 %v232, 0.0
    %v483 = vmax.f32 %v391, 0.0
    %v484 = vmax.f32 %v393, 0.0
    %v485 = vmax.f32 %v236, 0.0
    %v486 = vmax.f32 %v238, 0.0
    %v487 = vmax.f32 %v397, 0.0
    %v488 = vmax.f32 %v399, 0.0
    %v489 = vmax.f32 %v242, 0.0
    %v490 = vmax.f32 %v244, 0.0
    %v491 = vmax.f32 %v403, 0.0
    %v492 = vmax.f32 %v405, 0.0
    %v493 = vmax.f32 %v248, 0.0
    %v494 = vmax.f32 %v250, 0.0
    %v495 = vmax.f32 %v409, 0.0
    %v496 = vmax.f32 %v411, 0.0
    %v497 = vmax.f32 %v254, 0.0
    %v498 = vmax.f32 %v256, 0.0
    %v499 = vmax.f32 %v415, 0.0
    %v500 = vmax.f32 %v417, 0.0
    %v501 = vmax.f32 %v260, 0.0
    %v502 = vmax.f32 %v262, 0.0
    %v503 = vmax.f32 %v421, 0.0
    %v504 = vmax.f32 %v423, 0.0
    %v505 = vmax.f32 %v266, 0.0
    %v506 = vmax.f32 %v268, 0.0
    %v507 = vmax.f32 %v427, 0.0
    %v508 = vmax.f32 %v429, 0.0
    %v509 = vmax.f32 %v272, 0.0
    %v510 = vmax.f32 %v274, 0.0
    %v511 = vmax.f32 %v433, 0.0
    %v512 = vmax.f32 %v435, 0.0
    %v513 = vmax.f32 %v278, 0.0
    %v514 = vmax.f32 %v280, 0.0
    %v515 = vmax.f32 %v439, 0.0
    %v516 = vmax.f32 %v441, 0.0
    %v517 = vmax.f32 %v284, 0.0
    %v518 = vmax.f32 %v286, 0.0
    %v519 = vmax.f32 %v445, 0.0
    %v520 = vmax.f32 %v447, 0.0
    %v521 = vmax.f32 %v290, 0.0
    %v522 = vmax.f32 %v292, 0.0
    %v523 = vmax.f32 %v451, 0.0
    %v524 = vmax.f32 %v453, 0.0
    %v525 = vmax.f32 %v296, 0.0
    %v526 = vmax.f32 %v298, 0.0
    %v527 = vmax.f32 %v457, 0.0
    %v528 = vmax.f32 %v459, 0.0
    %v529 = vmax.f32 %v302, 0.0
    %v530 = vmax.f32 %v304, 0.0
    %v531 = vmax.f32 %v463, 0.0
    %v532 = vmax.f32 %v465, 0.0
    %v533 = vmax.f32 %v308, 0.0
    %v534 = vmax.f32 %v310, 0.0
    %v535 = vmax.f32 %v469, 0.0
    %v536 = vmax.f32 %v471, 0.0
    %v537 = vld [vmem:[%s3] sm:$0xff]
    %v538 = vld [vmem:[%s4] sm:$0xff]
    %540 = vset.pattern.permute.xlu0 0
    %541 = vperm.xlu0 %540, %v538
    %v542 = vpop.permute.xlu0 %541
    %544 = vmatprep.subr.mxu0 0.0
    %545 = vmatpush1.xpose.msra.mxu0 %v533
    %546 = vmatprep.subr.mxu0 0.0
    %547 = vmatpush1.xpose.msra.mxu0 %v529
    %548 = vmatprep.subr.mxu0 0.0
    %549 = vmatpush1.xpose.msra.mxu0 %v525
    %550 = vmatprep.subr.mxu0 0.0
    %551 = vmatpush1.xpose.msra.mxu0 %v521
    %552 = vmatprep.subr.mxu0 0.0
    %553 = vmatpush1.xpose.msra.mxu0 %v517
    %554 = vmatprep.subr.mxu0 0.0
    %555 = vmatpush1.xpose.msra.mxu0 %v513
    %556 = vmatprep.subr.mxu0 0.0
    %557 = vmatpush1.xpose.msra.mxu0 %v509
    %558 = vmatprep.subr.mxu0 0.0
    %559 = vmatpush1.xpose.msra.mxu0 %v505
    %560 = vmatprep.subr.mxu0 0.0
    %561 = vmatpush1.xpose.msra.mxu0 %v501
    %562 = vmatprep.subr.mxu0 0.0
    %563 = vmatpush1.xpose.msra.mxu0 %v497
    %564 = vmatprep.subr.mxu0 0.0
    %565 = vmatpush1.xpose.msra.mxu0 %v493
    %566 = vmatprep.subr.mxu0 0.0
    %567 = vmatpush1.xpose.msra.mxu0 %v489
    %568 = vmatprep.subr.mxu0 0.0
    %569 = vmatpush1.xpose.msra.mxu0 %v485
    %570 = vmatprep.subr.mxu0 0.0
    %571 = vmatpush1.xpose.msra.mxu0 %v481
    %572 = vmatprep.subr.mxu0 0.0
    %573 = vmatpush1.xpose.msra.mxu0 %v477
    %574 = vmatprep.subr.mxu0 0.0
    %575 = vmatpush1.xpose.msra.mxu0 %v473
    %576 = vmatprep.subr.mxu0 0.0
    %577 = vmatpush2.xpose.msra.mxu0 0.0
    %578 = vmatprep.subr.mxu0 0.0
    %579 = vmatpush2.xpose.msra.mxu0 0.0
    %580 = vmatprep.subr.mxu0 0.0
    %581 = vmatpush2.xpose.msra.mxu0 0.0
    %582 = vmatprep.subr.mxu0 0.0
    %583 = vmatpush2.xpose.msra.mxu0 0.0
    %584 = vmatprep.subr.mxu0 0.0
    %585 = vmatpush2.xpose.msra.mxu0 0.0
    %586 = vmatprep.subr.mxu0 0.0
    %587 = vmatpush2.xpose.msra.mxu0 0.0
    %588 = vmatprep.subr.mxu0 0.0
    %589 = vmatpush2.xpose.msra.mxu0 0.0
    %590 = vmatprep.subr.mxu0 0.0
    %591 = vmatpush2.xpose.msra.mxu0 0.0
    %592 = vmatprep.subr.mxu0 0.0
    %593 = vmatpush2.xpose.msra.mxu0 0.0
    %594 = vmatprep.subr.mxu0 0.0
    %595 = vmatpush2.xpose.msra.mxu0 0.0
    %596 = vmatprep.subr.mxu0 0.0
    %597 = vmatpush2.xpose.msra.mxu0 0.0
    %598 = vmatprep.subr.mxu0 0.0
    %599 = vmatpush2.xpose.msra.mxu0 0.0
    %600 = vmatprep.subr.mxu0 0.0
    %601 = vmatpush2.xpose.msra.mxu0 0.0
    %602 = vmatprep.subr.mxu0 0.0
    %603 = vmatpush2.xpose.msra.mxu0 0.0
    %604 = vmatprep.subr.mxu0 0.0
    %605 = vmatpush2.xpose.msra.mxu0 0.0
    %606 = vmatprep.subr.mxu0 0.0
    %607 = vmatpush2.xpose.msra.mxu0 0.0
    %608 = vmatprep.mubr.f32.mxu0 0.0
    %609 = vmatmul.mubr.f32.gmra.mxu0 %v537
    %v610 = vpop.f32.mrf.mxu0
    %v611 = vadd.f32 %v542, %v610
    %v612 = vpop.f32.mrf.mxu0
    %613 = vdwg.mxu0
    %v614 = vrot.slane %v611, 4
    %v615 = vmax.f32 %v611, %v614
    %v616 = vrot.slane %v615, 2
    %v617 = vmax.f32 %v615, %v616
    %v618 = vrot.slane %v617, 1
    %v619 = vmax.f32 %v617, %v618
    %v620 = vsub.f32 %v611, %v619
    %v621 = vmul.f32 %v620, 1.442695
    %v622 = vpow.pop %v621
    %v623 = vrot.slane %v622, 4
    %v624 = vadd.f32 %v622, %v623
    %v625 = vrot.slane %v624, 2
    %v626 = vadd.f32 %v624, %v625
    %v627 = vrot.slane %v626, 1
    %v628 = vadd.f32 %v626, %v627
    %v629 = vrcp.pop %v628
    %v630 = vmul.f32 %v622, %v629
    %631 = vst [vmem:[#allocation7] sm:$0xff] %v630
    %632 = vmatprep.subr.mxu0 0.0
    %633 = vmatpush1.xpose.msra.mxu0 %v534
    %634 = vmatprep.subr.mxu0 0.0
    %635 = vmatpush1.xpose.msra.mxu0 %v530
    %636 = vmatprep.subr.mxu0 0.0
    %637 = vmatpush1.xpose.msra.mxu0 %v526
    %638 = vmatprep.subr.mxu0 0.0
    %639 = vmatpush1.xpose.msra.mxu0 %v522
    %640 = vmatprep.subr.mxu0 0.0
    %641 = vmatpush1.xpose.msra.mxu0 %v518
    %642 = vmatprep.subr.mxu0 0.0
    %643 = vmatpush1.xpose.msra.mxu0 %v514
    %644 = vmatprep.subr.mxu0 0.0
    %645 = vmatpush1.xpose.msra.mxu0 %v510
    %646 = vmatprep.subr.mxu0 0.0
    %647 = vmatpush1.xpose.msra.mxu0 %v506
    %648 = vmatprep.subr.mxu0 0.0
    %649 = vmatpush1.xpose.msra.mxu0 %v502
    %650 = vmatprep.subr.mxu0 0.0
    %651 = vmatpush1.xpose.msra.mxu0 %v498
    %652 = vmatprep.subr.mxu0 0.0
    %653 = vmatpush1.xpose.msra.mxu0 %v494
    %654 = vmatprep.subr.mxu0 0.0
    %655 = vmatpush1.xpose.msra.mxu0 %v490
    %656 = vmatprep.subr.mxu0 0.0
    %657 = vmatpush1.xpose.msra.mxu0 %v486
    %658 = vmatprep.subr.mxu0 0.0
    %659 = vmatpush1.xpose.msra.mxu0 %v482
    %660 = vmatprep.subr.mxu0 0.0
    %661 = vmatpush1.xpose.msra.mxu0 %v478
    %662 = vmatprep.subr.mxu0 0.0
    %663 = vmatpush1.xpose.msra.mxu0 %v474
    %664 = vmatprep.subr.mxu0 0.0
    %665 = vmatpush2.xpose.msra.mxu0 0.0
    %666 = vmatprep.subr.mxu0 0.0
    %667 = vmatpush2.xpose.msra.mxu0 0.0
    %668 = vmatprep.subr.mxu0 0.0
    %669 = vmatpush2.xpose.msra.mxu0 0.0
    %670 = vmatprep.subr.mxu0 0.0
    %671 = vmatpush2.xpose.msra.mxu0 0.0
    %672 = vmatprep.subr.mxu0 0.0
    %673 = vmatpush2.xpose.msra.mxu0 0.0
    %674 = vmatprep.subr.mxu0 0.0
    %675 = vmatpush2.xpose.msra.mxu0 0.0
    %676 = vmatprep.subr.mxu0 0.0
    %677 = vmatpush2.xpose.msra.mxu0 0.0
    %678 = vmatprep.subr.mxu0 0.0
    %679 = vmatpush2.xpose.msra.mxu0 0.0
    %680 = vmatprep.subr.mxu0 0.0
    %681 = vmatpush2.xpose.msra.mxu0 0.0
    %682 = vmatprep.subr.mxu0 0.0
    %683 = vmatpush2.xpose.msra.mxu0 0.0
    %684 = vmatprep.subr.mxu0 0.0
    %685 = vmatpush2.xpose.msra.mxu0 0.0
    %686 = vmatprep.subr.mxu0 0.0
    %687 = vmatpush2.xpose.msra.mxu0 0.0
    %688 = vmatprep.subr.mxu0 0.0
    %689 = vmatpush2.xpose.msra.mxu0 0.0
    %690 = vmatprep.subr.mxu0 0.0
    %691 = vmatpush2.xpose.msra.mxu0 0.0
    %692 = vmatprep.subr.mxu0 0.0
    %693 = vmatpush2.xpose.msra.mxu0 0.0
    %694 = vmatprep.subr.mxu0 0.0
    %695 = vmatpush2.xpose.msra.mxu0 0.0
    %696 = vmatprep.mubr.f32.mxu0 0.0
    %697 = vmatmul.mubr.f32.gmra.mxu0 %v537
    %v698 = vpop.f32.mrf.mxu0
    %v699 = vadd.f32 %v542, %v698
    %v700 = vpop.f32.mrf.mxu0
    %701 = vdwg.mxu0
    %v702 = vrot.slane %v699, 4
    %v703 = vmax.f32 %v699, %v702
    %v704 = vrot.slane %v703, 2
    %v705 = vmax.f32 %v703, %v704
    %v706 = vrot.slane %v705, 1
    %v707 = vmax.f32 %v705, %v706
    %v708 = vsub.f32 %v699, %v707
    %v709 = vmul.f32 %v708, 1.442695
    %v710 = vpow.pop %v709
    %v711 = vrot.slane %v710, 4
    %v712 = vadd.f32 %v710, %v711
    %v713 = vrot.slane %v712, 2
    %v714 = vadd.f32 %v712, %v713
    %v715 = vrot.slane %v714, 1
    %v716 = vadd.f32 %v714, %v715
    %v717 = vrcp.pop %v716
    %v718 = vmul.f32 %v710, %v717
    %s719 = scalar_lea.vmem [#allocation7], 8
    %720 = vst [vmem:[%s719] sm:$0xff] %v718
    %721 = vmatprep.subr.mxu0 0.0
    %722 = vmatpush1.xpose.msra.mxu0 %v535
    %723 = vmatprep.subr.mxu0 0.0
    %724 = vmatpush1.xpose.msra.mxu0 %v531
    %725 = vmatprep.subr.mxu0 0.0
    %726 = vmatpush1.xpose.msra.mxu0 %v527
    %727 = vmatprep.subr.mxu0 0.0
    %728 = vmatpush1.xpose.msra.mxu0 %v523
    %729 = vmatprep.subr.mxu0 0.0
    %730 = vmatpush1.xpose.msra.mxu0 %v519
    %731 = vmatprep.subr.mxu0 0.0
    %732 = vmatpush1.xpose.msra.mxu0 %v515
    %733 = vmatprep.subr.mxu0 0.0
    %734 = vmatpush1.xpose.msra.mxu0 %v511
    %735 = vmatprep.subr.mxu0 0.0
    %736 = vmatpush1.xpose.msra.mxu0 %v507
    %737 = vmatprep.subr.mxu0 0.0
    %738 = vmatpush1.xpose.msra.mxu0 %v503
    %739 = vmatprep.subr.mxu0 0.0
    %740 = vmatpush1.xpose.msra.mxu0 %v499
    %741 = vmatprep.subr.mxu0 0.0
    %742 = vmatpush1.xpose.msra.mxu0 %v495
    %743 = vmatprep.subr.mxu0 0.0
    %744 = vmatpush1.xpose.msra.mxu0 %v491
    %745 = vmatprep.subr.mxu0 0.0
    %746 = vmatpush1.xpose.msra.mxu0 %v487
    %747 = vmatprep.subr.mxu0 0.0
    %748 = vmatpush1.xpose.msra.mxu0 %v483
    %749 = vmatprep.subr.mxu0 0.0
    %750 = vmatpush1.xpose.msra.mxu0 %v479
    %751 = vmatprep.subr.mxu0 0.0
    %752 = vmatpush1.xpose.msra.mxu0 %v475
    %753 = vmatprep.subr.mxu0 0.0
    %754 = vmatpush2.xpose.msra.mxu0 0.0
    %755 = vmatprep.subr.mxu0 0.0
    %756 = vmatpush2.xpose.msra.mxu0 0.0
    %757 = vmatprep.subr.mxu0 0.0
    %758 = vmatpush2.xpose.msra.mxu0 0.0
    %759 = vmatprep.subr.mxu0 0.0
    %760 = vmatpush2.xpose.msra.mxu0 0.0
    %761 = vmatprep.subr.mxu0 0.0
    %762 = vmatpush2.xpose.msra.mxu0 0.0
    %763 = vmatprep.subr.mxu0 0.0
    %764 = vmatpush2.xpose.msra.mxu0 0.0
    %765 = vmatprep.subr.mxu0 0.0
    %766 = vmatpush2.xpose.msra.mxu0 0.0
    %767 = vmatprep.subr.mxu0 0.0
    %768 = vmatpush2.xpose.msra.mxu0 0.0
    %769 = vmatprep.subr.mxu0 0.0
    %770 = vmatpush2.xpose.msra.mxu0 0.0
    %771 = vmatprep.subr.mxu0 0.0
    %772 = vmatpush2.xpose.msra.mxu0 0.0
    %773 = vmatprep.subr.mxu0 0.0
    %774 = vmatpush2.xpose.msra.mxu0 0.0
    %775 = vmatprep.subr.mxu0 0.0
    %776 = vmatpush2.xpose.msra.mxu0 0.0
    %777 = vmatprep.subr.mxu0 0.0
    %778 = vmatpush2.xpose.msra.mxu0 0.0
    %779 = vmatprep.subr.mxu0 0.0
    %780 = vmatpush2.xpose.msra.mxu0 0.0
    %781 = vmatprep.subr.mxu0 0.0
    %782 = vmatpush2.xpose.msra.mxu0 0.0
    %783 = vmatprep.subr.mxu0 0.0
    %784 = vmatpush2.xpose.msra.mxu0 0.0
    %785 = vmatprep.mubr.f32.mxu0 0.0
    %786 = vmatmul.mubr.f32.gmra.mxu0 %v537
    %v787 = vpop.f32.mrf.mxu0
    %v788 = vadd.f32 %v542, %v787
    %v789 = vpop.f32.mrf.mxu0
    %790 = vdwg.mxu0
    %v791 = vrot.slane %v788, 4
    %v792 = vmax.f32 %v788, %v791
    %v793 = vrot.slane %v792, 2
    %v794 = vmax.f32 %v792, %v793
    %v795 = vrot.slane %v794, 1
    %v796 = vmax.f32 %v794, %v795
    %v797 = vsub.f32 %v788, %v796
    %v798 = vmul.f32 %v797, 1.442695
    %v799 = vpow.pop %v798
    %v800 = vrot.slane %v799, 4
    %v801 = vadd.f32 %v799, %v800
    %v802 = vrot.slane %v801, 2
    %v803 = vadd.f32 %v801, %v802
    %v804 = vrot.slane %v803, 1
    %v805 = vadd.f32 %v803, %v804
    %v806 = vrcp.pop %v805
    %v807 = vmul.f32 %v799, %v806
    %s808 = scalar_lea.vmem [#allocation7], 16
    %809 = vst [vmem:[%s808] sm:$0xff] %v807
    %810 = vmatprep.subr.mxu0 0.0
    %811 = vmatpush1.xpose.msra.mxu0 %v536
    %812 = vmatprep.subr.mxu0 0.0
    %813 = vmatpush1.xpose.msra.mxu0 %v532
    %814 = vmatprep.subr.mxu0 0.0
    %815 = vmatpush1.xpose.msra.mxu0 %v528
    %816 = vmatprep.subr.mxu0 0.0
    %817 = vmatpush1.xpose.msra.mxu0 %v524
    %818 = vmatprep.subr.mxu0 0.0
    %819 = vmatpush1.xpose.msra.mxu0 %v520
    %820 = vmatprep.subr.mxu0 0.0
    %821 = vmatpush1.xpose.msra.mxu0 %v516
    %822 = vmatprep.subr.mxu0 0.0
    %823 = vmatpush1.xpose.msra.mxu0 %v512
    %824 = vmatprep.subr.mxu0 0.0
    %825 = vmatpush1.xpose.msra.mxu0 %v508
    %826 = vmatprep.subr.mxu0 0.0
    %827 = vmatpush1.xpose.msra.mxu0 %v504
    %828 = vmatprep.subr.mxu0 0.0
    %829 = vmatpush1.xpose.msra.mxu0 %v500
    %830 = vmatprep.subr.mxu0 0.0
    %831 = vmatpush1.xpose.msra.mxu0 %v496
    %832 = vmatprep.subr.mxu0 0.0
    %833 = vmatpush1.xpose.msra.mxu0 %v492
    %834 = vmatprep.subr.mxu0 0.0
    %835 = vmatpush1.xpose.msra.mxu0 %v488
    %836 = vmatprep.subr.mxu0 0.0
    %837 = vmatpush1.xpose.msra.mxu0 %v484
    %838 = vmatprep.subr.mxu0 0.0
    %839 = vmatpush1.xpose.msra.mxu0 %v480
    %840 = vmatprep.subr.mxu0 0.0
    %841 = vmatpush1.xpose.msra.mxu0 %v476
    %842 = vmatprep.subr.mxu0 0.0
    %843 = vmatpush2.xpose.msra.mxu0 0.0
    %844 = vmatprep.subr.mxu0 0.0
    %845 = vmatpush2.xpose.msra.mxu0 0.0
    %846 = vmatprep.subr.mxu0 0.0
    %847 = vmatpush2.xpose.msra.mxu0 0.0
    %848 = vmatprep.subr.mxu0 0.0
    %849 = vmatpush2.xpose.msra.mxu0 0.0
    %850 = vmatprep.subr.mxu0 0.0
    %851 = vmatpush2.xpose.msra.mxu0 0.0
    %852 = vmatprep.subr.mxu0 0.0
    %853 = vmatpush2.xpose.msra.mxu0 0.0
    %854 = vmatprep.subr.mxu0 0.0
    %855 = vmatpush2.xpose.msra.mxu0 0.0
    %856 = vmatprep.subr.mxu0 0.0
    %857 = vmatpush2.xpose.msra.mxu0 0.0
    %858 = vmatprep.subr.mxu0 0.0
    %859 = vmatpush2.xpose.msra.mxu0 0.0
    %860 = vmatprep.subr.mxu0 0.0
    %861 = vmatpush2.xpose.msra.mxu0 0.0
    %862 = vmatprep.subr.mxu0 0.0
    %863 = vmatpush2.xpose.msra.mxu0 0.0
    %864 = vmatprep.subr.mxu0 0.0
    %865 = vmatpush2.xpose.msra.mxu0 0.0
    %866 = vmatprep.subr.mxu0 0.0
    %867 = vmatpush2.xpose.msra.mxu0 0.0
    %868 = vmatprep.subr.mxu0 0.0
    %869 = vmatpush2.xpose.msra.mxu0 0.0
    %870 = vmatprep.subr.mxu0 0.0
    %871 = vmatpush2.xpose.msra.mxu0 0.0
    %872 = vmatprep.subr.mxu0 0.0
    %873 = vmatpush2.xpose.msra.mxu0 0.0
    %874 = vmatprep.mubr.f32.mxu0 0.0
    %875 = vmatmul.mubr.f32.gmra.mxu0 %v537
    %v876 = vpop.f32.mrf.mxu0
    %v877 = vadd.f32 %v542, %v876
    %v878 = vpop.f32.mrf.mxu0
    %879 = vdwg.mxu0
    %v880 = vrot.slane %v877, 4
    %v881 = vmax.f32 %v877, %v880
    %v882 = vrot.slane %v881, 2
    %v883 = vmax.f32 %v881, %v882
    %v884 = vrot.slane %v883, 1
    %v885 = vmax.f32 %v883, %v884
    %v886 = vsub.f32 %v877, %v885
    %v887 = vmul.f32 %v886, 1.442695
    %v888 = vpow.pop %v887
    %v889 = vrot.slane %v888, 4
    %v890 = vadd.f32 %v888, %v889
    %v891 = vrot.slane %v890, 2
    %v892 = vadd.f32 %v890, %v891
    %v893 = vrot.slane %v892, 1
    %v894 = vadd.f32 %v892, %v893
    %v895 = vrcp.pop %v894
    %v896 = vmul.f32 %v888, %v895
    %s897 = scalar_lea.vmem [#allocation7], 24
    %898 = vst [vmem:[%s897] sm:$0xff] %v896
    // Predicated region
    $region30: #{tpu_custom_call.1} parent=1 // pred_check
      _
    $region31: #{tpu_custom_call.1} parent=1 // pred_check_branch
      %900 = sbr.rel (0) target = $region33
    $region32: #{tpu_custom_call.1} parent=1 // pred_region
      %s902 = ssub.s32 512, 512
      %903 = vsyncadd [#allocation4], %s902
      %s904 = sshll.u32 [#allocation7], 4
      %s905 = int_to_ptr.vmem [resolvable:$true] %s904
      %910 = dma.vmem_to_hbm [thread:$0]  %s905, 512, %s5, [#allocation4], 128, 128, 8
    $region33: #{tpu_custom_call.1} parent=1 // pred_fallthru
      _
    // Predicated region
    $region34: #{tpu_custom_call.1} parent=1 // pred_check
      _
    $region35: #{tpu_custom_call.1} parent=1 // pred_check_branch
      %912 = sbr.rel (0) target = $region37
    $region36: #{tpu_custom_call.1} parent=1 // pred_region
      %913 = dma.done [#allocation4], 512
    $region37: #{tpu_custom_call.1} parent=1 // pred_fallthru
      _
    %914 = vsyncpa [#allocation3], 1
    %915 = vsyncpa [#allocation6], 1
    %916 = vsyncpa [#allocation4], 1

</llo_original>
